<compile_context>
chip_gen: v7x
topology: tpu7x:2x2x1
jax: 0.10.0
libtpu: 0.0.40
codegen_flags: <defaults>
</compile_context>

<pallas_src>
import math

import jax
import jax.numpy as jnp
from jax.experimental import pallas as pl
from jax.experimental.pallas import tpu as pltpu


def _copy_kernel(x_ref, o_ref):
    # Identity copy of the current (tm, tn) tile.
    o_ref[...] = x_ref[...]


def _choose_slab(total_elems, max_cols=4096):
    """Pick a lane-dense 2D layout (rows, cols) with cols a multiple of 128."""
    if total_elems % 128 != 0:
        return None
    cols = 128
    c = 256
    while c <= max_cols and total_elems % c == 0:
        cols = c
        c *= 2
    # Prefer at least 8 rows so sublanes are fully used.
    while cols > 128 and total_elems // cols < 8:
        cols //= 2
    return total_elems // cols, cols


def _choose_tile(rows, cols, itemsize, budget_bytes=2 * 1024 * 1024):
    """Tile (tm, tn): tn multiple of 128, tm multiple of 8 (or == rows),
    per-buffer bytes <= budget_bytes (VMEM-safe on v5e/v6e/v7x)."""
    tn = min(cols, 2048)                      # cols is a multiple of 128
    max_tm = max(1, budget_bytes // (tn * itemsize))
    if rows <= max_tm:
        tm = rows                             # full rows -> always legal
    else:
        tm = min(rows, max(8, (max_tm // 8) * 8))
    return tm, tn


def reshape_layer(x, shape, *, use_pallas_copy=True):
    """Pallas-backed equivalent of ReshapeLayer(shape).forward(x).

    x: array of shape (B, ...); returns array of shape (B, *shape).
    use_pallas_copy=False gives the recommended zero-copy production path.
    """
    num_batch = x.shape[0]
    flat_n = math.prod(x.shape[1:]) if x.ndim > 1 else 1
    target_n = math.prod(shape)
    # TODO(synk): torch .view()-style -1 dimension inference is not supported.
    assert flat_n == target_n, "ReshapeLayer: element count mismatch"

    if not use_pallas_copy:
        # Metadata-only reshape: zero HBM traffic (preferred in production).
        return x.reshape(num_batch, *shape)

    total = num_batch * flat_n
    slab = _choose_slab(total)
    if slab is None:
        # Non-128-aligned element count: a copy kernel would only emit masked
        # partial stores; the metadata reshape is strictly better.
        return x.reshape(num_batch, *shape)

    rows, cols = slab
    itemsize = jnp.dtype(x.dtype).itemsize
    tm, tn = _choose_tile(rows, cols, itemsize)

    x2d = x.reshape(rows, cols)

    out2d = pl.pallas_call(
        _copy_kernel,
        out_shape=jax.ShapeDtypeStruct((rows, cols), x.dtype),
        grid_spec=pltpu.PrefetchScalarGridSpec(
            num_scalar_prefetch=0,
            grid=(pl.cdiv(rows, tm), pl.cdiv(cols, tn)),
            in_specs=[pl.BlockSpec((tm, tn), lambda i, j: (i, j))],
            out_specs=pl.BlockSpec((tm, tn), lambda i, j: (i, j)),
        ),
        # Let XLA reuse the input buffer for the output (identity copy).
        input_output_aliases={0: 0},
        compiler_params=pltpu.CompilerParams(
            dimension_semantics=("parallel", "parallel"),
            vmem_limit_bytes=32 * 1024 * 1024,
        ),
    )(x2d)

    return out2d.reshape(num_batch, *shape)


if __name__ == "__main__":
    key = jax.random.PRNGKey(0)
    k1, k2 = jax.random.split(key)

    # Case 1: small NCHW conv-style feature map through the Pallas copy path.
    B, C, H, W = 2, 4, 16, 16
    x = jax.random.normal(k1, (B, C, H, W), dtype=jnp.float32)
    target_shape = (16, 64)                  # 16 * 64 == 4 * 16 * 16
    y = reshape_layer(x, target_shape, use_pallas_copy=True)
    jax.block_until_ready(y)
    assert y.shape == (B,) + target_shape
    assert jnp.array_equal(y, x.reshape(B, *target_shape))

    # Case 2: slightly larger map -> exercises the 2-axis tiled grid (tn=2048).
    x2 = jax.random.normal(k2, (4, 16, 32, 32), dtype=jnp.float32)
    y2 = reshape_layer(x2, (16, 1024), use_pallas_copy=True)
    jax.block_until_ready(y2)
    assert jnp.array_equal(y2, x2.reshape(4, 16, 1024))

    # Case 3: element count not a multiple of 128 -> zero-copy fallback.
    x3 = jnp.arange(2 * 3 * 5 * 7, dtype=jnp.float32).reshape(2, 3, 5, 7)
    y3 = reshape_layer(x3, (105,), use_pallas_copy=True)
    assert jnp.array_equal(y3, x3.reshape(2, 105))

    # Production (recommended) zero-copy path.
    y0 = reshape_layer(x, target_shape, use_pallas_copy=False)
    assert jnp.array_equal(y0, x.reshape(B, *target_shape))

    print("KERNEL_OK")
</pallas_src>

<mosaic_0001>
module attributes {stable_mosaic.version = 11 : i64} {
  func.func @_copy_kernel(%arg0: i32, %arg1: i32, %arg2: memref<8x256xf32, #tpu.memory_space<vmem>>, %arg3: memref<8x256xf32, #tpu.memory_space<vmem>>) attributes {dimension_semantics = [#tpu.dimension_semantics<parallel>, #tpu.dimension_semantics<parallel>], iteration_bounds = array<i64: 1, 1>, scalar_prefetch = 0 : i64, scratch_operands = 0 : i64, tpu.core_type = #tpu.core_type<tc>, window_params = [{transform_indices = @transform_0, window_bounds = array<i64: 8, 256>}, {transform_indices = @transform_1, window_bounds = array<i64: 8, 256>}]} {
    %c0 = arith.constant 0 : index
    %c0_0 = arith.constant 0 : index
    %0 = vector.load %arg2[%c0, %c0_0] : memref<8x256xf32, #tpu.memory_space<vmem>>, vector<8x256xf32>
    %c0_1 = arith.constant 0 : index
    %c0_2 = arith.constant 0 : index
    %1 = vector.load %arg3[%c0_1, %c0_2] : memref<8x256xf32, #tpu.memory_space<vmem>>, vector<8x256xf32>
    tpu.vector_store %arg3[%c0_1, %c0_2], %0 {strides = array<i32>} : memref<8x256xf32, #tpu.memory_space<vmem>>, vector<8x256xf32>,
    return
  }
  func.func @transform_0(%arg0: i32, %arg1: i32) -> (i32, i32) {
    %c0_i32 = arith.constant 0 : i32
    return %arg0, %arg1 : i32, i32
  }
  func.func @transform_1(%arg0: i32, %arg1: i32) -> (i32, i32) {
    %c0_i32 = arith.constant 0 : i32
    return %arg0, %arg1 : i32, i32
  }
}

</mosaic_0001>

<llo_original>
// kernel: tpu_custom_call.1
$region0: #{tpu_custom_call.1}
  #allocation0 [shape = 'u32[]', space=smem, size = 0x4, offset = 0x4, fixed_abs, tag = 'smem constant byte address 0x4 - core index']
  #allocation1 [shape = 'u32[144,128]{1,0:T(1,128)}', space=vmem, size = 0x12000, scoped, tag = 'internal scratch']
  %s0 = inlined_call_operand.hbm [shape: f32[8,256], index: 0, kind: input, shape index: {}, may-alias: {0,1}]
  %s1 = inlined_call_operand.hbm [shape: f32[8,256], index: 1, kind: output, shape index: {}, may-alias: {0,1}]
  %s2 = sld [smem:[#allocation0]]
  $region18: #{tpu_custom_call.1} parent=0
    _
  %s4 = ssub.s32 1, %s2
  %s5 = scalar_select 0, %s4, %s2
  $region1: #{tpu_custom_call.1} parent=0
    #allocation2 [shape = 'u8[8192]{0}', space=vmem, size = 0x2000, scoped, tag = 'input window, operand 0, single buffered']
    #allocation3 [shape = 's32[1]{0}', space=sflag, size = 0x4, scoped, tag = 'scoped memory for tpu_custom_call.1']
    #allocation4 [shape = 's32[1]{0}', space=sflag, size = 0x4, scoped, tag = 'scoped memory for tpu_custom_call.1']
    #allocation5 [shape = 'u8[8192]{0}', space=vmem, size = 0x2000, scoped, tag = 'output window, operand 0, single buffered']
    %6 = vsyncpa [#allocation3], 0
    %7 = vsyncpa [#allocation4], 0
    // Predicated region
    $region2: #{tpu_custom_call.1} parent=1 // pred_check
      _
    $region3: #{tpu_custom_call.1} parent=1 // pred_check_branch
      %9 = sbr.rel (0) target = $region5
    $region4: #{tpu_custom_call.1} parent=1 // pred_region
      %s11 = ssub.s32 256, 256
      %12 = vsyncadd [#allocation3], %s11
      %s14 = sshll.u32 [#allocation2], 4
      %s15 = int_to_ptr.vmem [resolvable:$true] %s14
      %17 = dma.hbm_to_vmem [thread:$0]  %s0, 256, %s15, [#allocation3]
    $region5: #{tpu_custom_call.1} parent=1 // pred_fallthru
      _
    // Predicated region
    $region6: #{tpu_custom_call.1} parent=1 // pred_check
      _
    $region7: #{tpu_custom_call.1} parent=1 // pred_check_branch
      %19 = sbr.rel (0) target = $region9
    $region8: #{tpu_custom_call.1} parent=1 // pred_region
      %20 = dma.done [#allocation3], 256
    $region9: #{tpu_custom_call.1} parent=1 // pred_fallthru
      _
    %v21 = vld [vmem:[#allocation2] sm:$0xff]
    %v22 = vld [vmem:[#allocation2 + $0x8] sm:$0xff]
    %23 = vst [vmem:[#allocation5] sm:$0xff] %v21
    %24 = vst [vmem:[#allocation5 + $0x8] sm:$0xff] %v22
    // Predicated region
    $region10: #{tpu_custom_call.1} parent=1 // pred_check
      _
    $region11: #{tpu_custom_call.1} parent=1 // pred_check_branch
      %26 = sbr.rel (0) target = $region13
    $region12: #{tpu_custom_call.1} parent=1 // pred_region
      %s28 = ssub.s32 256, 256
      %29 = vsyncadd [#allocation4], %s28
      %s31 = sshll.u32 [#allocation5], 4
      %s32 = int_to_ptr.vmem [resolvable:$true] %s31
      %34 = dma.vmem_to_hbm [thread:$0]  %s32, 256, %s1, [#allocation4]
    $region13: #{tpu_custom_call.1} parent=1 // pred_fallthru
      _
    // Predicated region
    $region14: #{tpu_custom_call.1} parent=1 // pred_check
      _
    $region15: #{tpu_custom_call.1} parent=1 // pred_check_branch
      %36 = sbr.rel (0) target = $region17
    $region16: #{tpu_custom_call.1} parent=1 // pred_region
      %37 = dma.done [#allocation4], 256
    $region17: #{tpu_custom_call.1} parent=1 // pred_fallthru
      _
    %38 = vsyncpa [#allocation3], 1
    %39 = vsyncpa [#allocation4], 1

</llo_original>
